<compile_context>
chip_gen: v6e
topology: v6e:2x2x1
jax: 0.10.0
libtpu: 0.0.40
codegen_flags: <defaults>
</compile_context>

<pallas_src>
import jax
import jax.numpy as jnp
from jax.experimental import pallas as pl
from jax.experimental.pallas import tpu as pltpu

# Constants from the PyTorch module
CHUNK = 400
L = 50
JUMP = CHUNK // L          # 8 frames per chunk
HOP = L // 2               # 25 (overlap-and-add hop)
N = 128                    # Decoder.N default (encoder basis channels)
B_BOTTLENECK = 64          # separator bottleneck channels

HOP_PAD = 32               # HOP padded to a 32-aligned lane group
OUT_LANES = 128            # lane-dense output last dim (wrapper slices [:HOP])
MAX_WBLK = 16              # windows per grid block -> M = 16*8 = 128 MXU rows


def decoder_kernel(m_ref, enc_ref, wmask_ref, wb_ref, out_ref):
    # m_ref    : [M, B]           M = wblk*JUMP time-major separator features
    # enc_ref  : [M, N]           matching encoder-buffer frames
    # wmask_ref: [B, N]           1x1 mask-conv weight (pre-transposed)
    # wb_ref   : [N, 2*HOP_PAD]   fused basis weight (both L//2 halves, zero-padded 25->32)
    # out_ref  : [wblk, JUMP+1, OUT_LANES]
    wblk = out_ref.shape[0]

    # 1x1 mask conv on the MXU: [M, B] @ [B, N] -> [M, N]
    pre = jnp.dot(m_ref[...], wmask_ref[...], preferred_element_type=jnp.float32)
    # ReLU mask * encoder buffer (VPU)
    masked = jnp.maximum(pre, 0.0) * enc_ref[...]
    # Fused basis projection: both HOP-halves of every frame in one MXU push -> [M, 2*HOP_PAD]
    frames = jnp.dot(masked, wb_ref[...], preferred_element_type=jnp.float32)
    fr = frames.reshape(wblk, JUMP, 2 * HOP_PAD)

    # Overlap-and-add (hop = L // 2), entirely in registers:
    #   out[w, j, :HOP] = frames[w, j, :HOP] (j < JUMP)  +  frames[w, j-1, HOP:] (j >= 1)
    first = jnp.pad(fr[:, :, 0:HOP_PAD], ((0, 0), (0, 1), (0, 0)))          # rows 0..JUMP-1
    second = jnp.pad(fr[:, :, HOP_PAD:2 * HOP_PAD], ((0, 0), (1, 0), (0, 0)))  # rows 1..JUMP
    ola = first + second                                                     # [wblk, JUMP+1, HOP_PAD]

    # Single full-block (lane-dense, unmasked) store; lanes HOP_PAD..OUT_LANES are zero padding.
    out_ref[...] = jnp.pad(ola, ((0, 0), (0, 0), (0, OUT_LANES - HOP_PAD)))


def prepare_decoder_params(w_mask, w_basis):
    """One-time (model-init) weight layout. Do NOT call per streaming step.
       w_mask : [N, B, 1]  Conv1d(B, N, 1, bias=False) weight
       w_basis: [L, N]     Linear(N, L, bias=False) weight
    """
    wmask_t = jnp.transpose(w_mask[:, :, 0], (1, 0)).astype(jnp.float32)      # [B, N]
    wb1 = jnp.transpose(w_basis[:HOP, :], (1, 0)).astype(jnp.float32)         # [N, HOP]
    wb2 = jnp.transpose(w_basis[HOP:, :], (1, 0)).astype(jnp.float32)         # [N, HOP]
    pad = jnp.zeros((w_basis.shape[1], HOP_PAD - HOP), jnp.float32)
    wb_fused = jnp.concatenate([wb1, pad, wb2, pad], axis=1)                  # [N, 2*HOP_PAD]
    return wmask_t, wb_fused


def _pick_wblk(W, max_wblk=MAX_WBLK):
    for cand in range(min(W, max_wblk), 0, -1):
        if W % cand == 0:
            return cand
    return 1


def decoder_forward_batched(encoder_buffer, estimate_mask, wmask_t, wb_fused):
    """encoder_buffer: [W, 1, N, JUMP]  f32  (last JUMP frames of the encoder buffer per window)
       estimate_mask : [W, S, 1, B, K]  f32  (separator feature buffer, K >= JUMP)
       wmask_t       : [B, N]           f32  (from prepare_decoder_params)
       wb_fused      : [N, 2*HOP_PAD]   f32  (from prepare_decoder_params)
       returns       : [W, 1, 1, (JUMP-1)*HOP + L] f32
    """
    W = encoder_buffer.shape[0]
    Bc = wmask_t.shape[0]
    Nc = wmask_t.shape[1]

    # Per-step activation layout only (time-major 2-D tiles feeding the MXU).
    em = estimate_mask[:, -1, 0, :, -JUMP:]                                              # [W, B, JUMP]
    m_in = jnp.transpose(em, (0, 2, 1)).reshape(W * JUMP, Bc).astype(jnp.float32)        # [W*JUMP, B]
    enc = jnp.transpose(encoder_buffer[:, 0], (0, 2, 1)).reshape(W * JUMP, Nc).astype(jnp.float32)  # [W*JUMP, N]

    wblk = _pick_wblk(W)
    nb = W // wblk

    out_pad = pl.pallas_call(
        decoder_kernel,
        out_shape=jax.ShapeDtypeStruct((W, JUMP + 1, OUT_LANES), jnp.float32),
        grid=(nb,),
        in_specs=[
            pl.BlockSpec((wblk * JUMP, Bc), lambda i: (i, 0)),
            pl.BlockSpec((wblk * JUMP, Nc), lambda i: (i, 0)),
            pl.BlockSpec((Bc, Nc), lambda i: (0, 0)),
            pl.BlockSpec((Nc, 2 * HOP_PAD), lambda i: (0, 0)),
        ],
        out_specs=pl.BlockSpec((wblk, JUMP + 1, OUT_LANES), lambda i: (i, 0, 0)),
        compiler_params=pltpu.CompilerParams(dimension_semantics=("parallel",)),
    )(m_in, enc, wmask_t, wb_fused)

    T = (JUMP - 1) * HOP + L
    # Layout glue only: drop lane padding, flatten the 9 x 25 OLA rows into 225 samples.
    return out_pad[:, :, :HOP].reshape(W, 1, 1, T)


def decoder_reference(encoder_buffer, estimate_mask, w_mask, w_basis):
    """Pure-JAX per-window reference mirroring the PyTorch forward.
       encoder_buffer: [1, N, JUMP];  estimate_mask: [S, 1, B, K]."""
    em = estimate_mask[-1, :, :, -JUMP:]                         # [1, B, JUMP]
    conv = jnp.einsum('oi,bit->bot', w_mask[:, :, 0], em)        # [1, N, JUMP]
    mask = jax.nn.relu(conv).reshape(1, 1, N, JUMP)
    source_w = encoder_buffer[:, None, :, :] * mask              # [1, 1, N, JUMP]
    source_w = jnp.swapaxes(source_w, 2, 3)                      # [1, 1, JUMP, N]
    frames = jnp.einsum('mckn,ln->mckl', source_w, w_basis)      # [1, 1, JUMP, L]
    T = (JUMP - 1) * HOP + L
    out = jnp.zeros((1, 1, T), jnp.float32)
    for k in range(JUMP):
        out = out.at[:, :, k * HOP:k * HOP + L].add(frames[:, :, k, :])
    return out


if __name__ == "__main__":
    key = jax.random.PRNGKey(0)
    k1, k2, k3, k4 = jax.random.split(key, 4)

    W = 32        # decode windows batched per kernel call (2 grid blocks of M=128 rows)
    S, K = 3, 16  # history length / time frames of the separator feature buffer
    encoder_buffer = jax.random.normal(k1, (W, 1, N, JUMP), jnp.float32)
    estimate_mask = jax.random.normal(k2, (W, S, 1, B_BOTTLENECK, K), jnp.float32)
    # Deterministic "parameters" (shapes from the module's __init__ / Conv-TasNet defaults)
    w_mask = 0.05 * jax.random.normal(k3, (N, B_BOTTLENECK, 1), jnp.float32)   # Conv1d(B, N, 1)
    w_basis = 0.05 * jax.random.normal(k4, (L, N), jnp.float32)                # Linear(N, L)

    # One-time weight layout (model init), hoisted out of the per-step path.
    wmask_t, wb_fused = prepare_decoder_params(w_mask, w_basis)

    out = jax.jit(decoder_forward_batched)(encoder_buffer, estimate_mask, wmask_t, wb_fused)
    out = jax.block_until_ready(out)

    ref = jax.vmap(decoder_reference, in_axes=(0, 0, None, None))(
        encoder_buffer, estimate_mask, w_mask, w_basis)

    T = (JUMP - 1) * HOP + L
    assert out.shape == (W, 1, 1, T), out.shape
    assert jnp.allclose(out, ref, atol=1e-4, rtol=1e-4), float(jnp.max(jnp.abs(out - ref)))

    print("KERNEL_OK")
</pallas_src>

<mosaic_0001>
module attributes {stable_mosaic.version = 11 : i64} {
  func.func @decoder_kernel(%arg0: i32, %arg1: memref<128x64xf32, #tpu.memory_space<vmem>>, %arg2: memref<128x128xf32, #tpu.memory_space<vmem>>, %arg3: memref<64x128xf32, #tpu.memory_space<vmem>>, %arg4: memref<128x64xf32, #tpu.memory_space<vmem>>, %arg5: memref<16x9x128xf32, #tpu.memory_space<vmem>>) attributes {dimension_semantics = [#tpu.dimension_semantics<parallel>], iteration_bounds = array<i64: 2>, scalar_prefetch = 0 : i64, scratch_operands = 0 : i64, tpu.core_type = #tpu.core_type<tc>, window_params = [{transform_indices = @transform_0, window_bounds = array<i64: 128, 64>}, {transform_indices = @transform_1, window_bounds = array<i64: 128, 128>}, {pipeline_mode = #tpu.pipeline_mode<synchronous>, transform_indices = @transform_2, window_bounds = array<i64: 64, 128>}, {pipeline_mode = #tpu.pipeline_mode<synchronous>, transform_indices = @transform_3, window_bounds = array<i64: 128, 64>}, {transform_indices = @transform_4, window_bounds = array<i64: 16, 9, 128>}]} {
    %c0 = arith.constant 0 : index
    %c0_0 = arith.constant 0 : index
    %0 = vector.load %arg1[%c0, %c0_0] : memref<128x64xf32, #tpu.memory_space<vmem>>, vector<128x64xf32>
    %c0_1 = arith.constant 0 : index
    %c0_2 = arith.constant 0 : index
    %1 = vector.load %arg3[%c0_1, %c0_2] : memref<64x128xf32, #tpu.memory_space<vmem>>, vector<64x128xf32>
    %cst = arith.constant dense<0.000000e+00> : vector<128x128xf32>
    %2 = tpu.matmul %0, %1, %cst {dimension_numbers = #tpu.dot_dimension_numbers<[1], [0], [0], [1], [0, 0, 1, 1], [], []>} : vector<128x64xf32>, vector<64x128xf32>, vector<128x128xf32> -> vector<128x128xf32>
    %cst_3 = arith.constant 0.000000e+00 : f32
    %3 = vector.broadcast %cst_3 : f32 to vector<128x128xf32>
    %4 = arith.maximumf %2, %3 : vector<128x128xf32>
    %c0_4 = arith.constant 0 : index
    %c0_5 = arith.constant 0 : index
    %5 = vector.load %arg2[%c0_4, %c0_5] : memref<128x128xf32, #tpu.memory_space<vmem>>, vector<128x128xf32>
    %6 = arith.mulf %4, %5 : vector<128x128xf32>
    %c0_6 = arith.constant 0 : index
    %c0_7 = arith.constant 0 : index
    %7 = vector.load %arg4[%c0_6, %c0_7] : memref<128x64xf32, #tpu.memory_space<vmem>>, vector<128x64xf32>
    %cst_8 = arith.constant dense<0.000000e+00> : vector<128x64xf32>
    %8 = tpu.matmul %6, %7, %cst_8 {dimension_numbers = #tpu.dot_dimension_numbers<[1], [0], [0], [1], [0, 0, 1, 1], [], []>} : vector<128x128xf32>, vector<128x64xf32>, vector<128x64xf32> -> vector<128x64xf32>
    %9 = vector.shape_cast %8 : vector<128x64xf32> to vector<16x8x64xf32>
    %10 = vector.extract_strided_slice %9 {offsets = [0, 0, 0], sizes = [16, 8, 32], strides = [1, 1, 1]} : vector<16x8x64xf32> to vector<16x8x32xf32>
    %c0_i32 = arith.constant 0 : i32
    %11 = arith.sitofp %c0_i32 : i32 to f32
    %12 = vector.broadcast %11 : f32 to vector<16x1x32xf32>
    %13 = tpu.concatenate %10, %12 in 1 : vector<16x8x32xf32>, vector<16x1x32xf32> -> vector<16x9x32xf32>
    %14 = vector.extract_strided_slice %9 {offsets = [0, 0, 32], sizes = [16, 8, 32], strides = [1, 1, 1]} : vector<16x8x64xf32> to vector<16x8x32xf32>
    %c0_i32_9 = arith.constant 0 : i32
    %15 = arith.sitofp %c0_i32_9 : i32 to f32
    %16 = vector.broadcast %15 : f32 to vector<16x1x32xf32>
    %17 = tpu.concatenate %16, %14 in 1 : vector<16x1x32xf32>, vector<16x8x32xf32> -> vector<16x9x32xf32>
    %18 = arith.addf %13, %17 : vector<16x9x32xf32>
    %c0_i32_10 = arith.constant 0 : i32
    %19 = arith.sitofp %c0_i32_10 : i32 to f32
    %20 = vector.broadcast %19 : f32 to vector<16x9x96xf32>
    %21 = tpu.concatenate %18, %20 in 2 : vector<16x9x32xf32>, vector<16x9x96xf32> -> vector<16x9x128xf32>
    %c0_11 = arith.constant 0 : index
    %c0_12 = arith.constant 0 : index
    %c0_13 = arith.constant 0 : index
    %22 = vector.load %arg5[%c0_11, %c0_12, %c0_13] : memref<16x9x128xf32, #tpu.memory_space<vmem>>, vector<16x9x128xf32>
    tpu.vector_store %arg5[%c0_11, %c0_12, %c0_13], %21 {strides = array<i32>} : memref<16x9x128xf32, #tpu.memory_space<vmem>>, vector<16x9x128xf32>,
    return
  }
  func.func @transform_0(%arg0: i32) -> (i32, i32) {
    %c0_i32 = arith.constant 0 : i32
    %c0_i32_0 = arith.constant 0 : i32
    return %arg0, %c0_i32 : i32, i32
  }
  func.func @transform_1(%arg0: i32) -> (i32, i32) {
    %c0_i32 = arith.constant 0 : i32
    %c0_i32_0 = arith.constant 0 : i32
    return %arg0, %c0_i32 : i32, i32
  }
  func.func @transform_2(%arg0: i32) -> (i32, i32) {
    %c0_i32 = arith.constant 0 : i32
    %c0_i32_0 = arith.constant 0 : i32
    %c0_i32_1 = arith.constant 0 : i32
    return %c0_i32, %c0_i32_0 : i32, i32
  }
  func.func @transform_3(%arg0: i32) -> (i32, i32) {
    %c0_i32 = arith.constant 0 : i32
    %c0_i32_0 = arith.constant 0 : i32
    %c0_i32_1 = arith.constant 0 : i32
    return %c0_i32, %c0_i32_0 : i32, i32
  }
  func.func @transform_4(%arg0: i32) -> (i32, i32, i32) {
    %c0_i32 = arith.constant 0 : i32
    %c0_i32_0 = arith.constant 0 : i32
    %c0_i32_1 = arith.constant 0 : i32
    return %arg0, %c0_i32, %c0_i32_0 : i32, i32, i32
  }
}

</mosaic_0001>

<llo_original>
// kernel: decoder_forward_batched.1
$region0: #{decoder_forward_batched.1}
  #allocation0 [shape = 'u32[]', space=smem, size = 0x4, offset = 0x4, fixed_abs, tag = 'smem constant byte address 0x4 - core index']
  #allocation1 [shape = 'u32[144,128]{1,0:T(1,128)}', space=vmem, size = 0x12000, scoped, tag = 'internal scratch']
  %s0 = inlined_call_operand.vmem [shape: f32[256,64], index: 0, kind: input, shape index: {}]
  %s1 = inlined_call_operand.vmem [shape: f32[256,128], index: 1, kind: input, shape index: {}]
  %s2 = inlined_call_operand.vmem [shape: f32[64,128], index: 2, kind: input, shape index: {}]
  %s3 = inlined_call_operand.vmem [shape: f32[128,64], index: 3, kind: input, shape index: {}]
  %s4 = inlined_call_operand.vmem [shape: f32[32,9,128], index: 4, kind: output, shape index: {}]
  %s5 = sld [smem:[#allocation0]]
  $region49: #{decoder_forward_batched.1} parent=0
    _
  %s7 = ssub.s32 1, %s5
  %s8 = scalar_select 0, %s7, %s5
  loop: start=0, step=1, limit=4
  $region2: #{decoder_forward_batched.1} parent=0 // loop_pre_header
    _
  $region3: #{decoder_forward_batched.1} parent=0 // loop_header
    %s10 = sphi 0, %s14
    %p11 = scmp.ge.s32.totalorder %s10, 4
    %s20 = sphi 0, %s22
    %s23 = sphi 0, %s20
    %s24 = sphi 0, %s23
    %s40 = sphi 0, %s24
    %s46 = sphi 0, %s48
    %s49 = sphi 0, %s46
    %s50 = sphi 0, %s49
    %s66 = sphi 0, %s50
    %s70 = sphi 0, %s70
    %s72 = sphi 0, %s70
    %s73 = sphi 0, %s72
    %s87 = sphi 0, %s73
    %s91 = sphi 0, %s91
    %s93 = sphi 0, %s91
    %s94 = sphi 0, %s93
    %s108 = sphi 0, %s94
    %s114 = sphi 0, %s116
    %s117 = sphi 0, %s114
    %s118 = sphi 0, %s117
    %s134 = sphi 0, %s118
  $region4: #{decoder_forward_batched.1} parent=0 // loop_header_branch
    %13 = sbr.rel (%p11) target = $region8
  $region5: #{decoder_forward_batched.1} parent=0 // loop_body
    %s15 = ssub.s32 %s10, 1
    %s16 = ssub.s32 %s10, 2
    %s17 = sadd.s32 %s10, 1
    %s18 = ssub.s32 %s10, %s17
    %p19 = scmp.eq.s32.totalorder %s18, 0
    %s21 = sadd.s32 %s20, 1
    %s22 = scalar_select %p19, %s20, %s21
    %p25 = pneg %p19
    %p26 = scmp.eq.s32.totalorder %s10, 1
    %p27 = por %p25, %p26
    %p28 = scmp.ne.s32.totalorder %s20, %s23
    %p29 = scmp.eq.s32.totalorder %s10, 0
    %p30 = por %p28, %p29
    %p31 = scmp.ne.s32.totalorder %s20, %s23
    %p32 = scmp.eq.s32.totalorder %s15, 1
    %p33 = por %p31, %p32
    %p34 = scmp.ne.s32.totalorder %s23, %s24
    %p35 = scmp.eq.s32.totalorder %s15, 0
    %p36 = por %p34, %p35
    %p37 = scmp.ne.s32.totalorder %s23, %s24
    %p38 = scmp.eq.s32.totalorder %s16, 1
    %p39 = por %p37, %p38
    %p41 = scmp.ne.s32.totalorder %s24, %s40
    %p42 = scmp.eq.s32.totalorder %s16, 0
    %p43 = por %p41, %p42
    %s44 = ssub.s32 %s10, %s17
    %p45 = scmp.eq.s32.totalorder %s44, 0
    %s47 = sadd.s32 %s46, 1
    %s48 = scalar_select %p45, %s46, %s47
    %p51 = pneg %p45
    %p52 = scmp.eq.s32.totalorder %s10, 1
    %p53 = por %p51, %p52
    %p54 = scmp.ne.s32.totalorder %s46, %s49
    %p55 = scmp.eq.s32.totalorder %s10, 0
    %p56 = por %p54, %p55
    %p57 = scmp.ne.s32.totalorder %s46, %s49
    %p58 = scmp.eq.s32.totalorder %s15, 1
    %p59 = por %p57, %p58
    %p60 = scmp.ne.s32.totalorder %s49, %s50
    %p61 = scmp.eq.s32.totalorder %s15, 0
    %p62 = por %p60, %p61
    %p63 = scmp.ne.s32.totalorder %s49, %s50
    %p64 = scmp.eq.s32.totalorder %s16, 1
    %p65 = por %p63, %p64
    %p67 = scmp.ne.s32.totalorder %s50, %s66
    %p68 = scmp.eq.s32.totalorder %s16, 0
    %p69 = por %p67, %p68
    %s71 = sadd.s32 %s70, 1
    %p74 = scmp.eq.s32.totalorder %s10, 1
    %p75 = scmp.ne.s32.totalorder %s70, %s72
    %p76 = scmp.eq.s32.totalorder %s10, 0
    %p77 = por %p75, %p76
    %p78 = scmp.ne.s32.totalorder %s70, %s72
    %p79 = scmp.eq.s32.totalorder %s15, 1
    %p80 = por %p78, %p79
    %p81 = scmp.ne.s32.totalorder %s72, %s73
    %p82 = scmp.eq.s32.totalorder %s15, 0
    %p83 = por %p81, %p82
    %p84 = scmp.ne.s32.totalorder %s72, %s73
    %p85 = scmp.eq.s32.totalorder %s16, 1
    %p86 = por %p84, %p85
    %p88 = scmp.ne.s32.totalorder %s73, %s87
    %p89 = scmp.eq.s32.totalorder %s16, 0
    %p90 = por %p88, %p89
    %s92 = sadd.s32 %s91, 1
    %p95 = scmp.eq.s32.totalorder %s10, 1
    %p96 = scmp.ne.s32.totalorder %s91, %s93
    %p97 = scmp.eq.s32.totalorder %s10, 0
    %p98 = por %p96, %p97
    %p99 = scmp.ne.s32.totalorder %s91, %s93
    %p100 = scmp.eq.s32.totalorder %s15, 1
    %p101 = por %p99, %p100
    %p102 = scmp.ne.s32.totalorder %s93, %s94
    %p103 = scmp.eq.s32.totalorder %s15, 0
    %p104 = por %p102, %p103
    %p105 = scmp.ne.s32.totalorder %s93, %s94
    %p106 = scmp.eq.s32.totalorder %s16, 1
    %p107 = por %p105, %p106
    %p109 = scmp.ne.s32.totalorder %s94, %s108
    %p110 = scmp.eq.s32.totalorder %s16, 0
    %p111 = por %p109, %p110
    %s112 = ssub.s32 %s10, %s17
    %p113 = scmp.eq.s32.totalorder %s112, 0
    %s115 = sadd.s32 %s114, 1
    %s116 = scalar_select %p113, %s114, %s115
    %p119 = pneg %p113
    %p120 = scmp.eq.s32.totalorder %s10, 1
    %p121 = por %p119, %p120
    %p122 = scmp.ne.s32.totalorder %s114, %s117
    %p123 = scmp.eq.s32.totalorder %s10, 0
    %p124 = por %p122, %p123
    %p125 = scmp.ne.s32.totalorder %s114, %s117
    %p126 = scmp.eq.s32.totalorder %s15, 1
    %p127 = por %p125, %p126
    %p128 = scmp.ne.s32.totalorder %s117, %s118
    %p129 = scmp.eq.s32.totalorder %s15, 0
    %p130 = por %p128, %p129
    %p131 = scmp.ne.s32.totalorder %s117, %s118
    %p132 = scmp.eq.s32.totalorder %s16, 1
    %p133 = por %p131, %p132
    %p135 = scmp.ne.s32.totalorder %s118, %s134
    %p136 = scmp.eq.s32.totalorder %s16, 0
    %p137 = por %p135, %p136
    %p138 = scmp.le.s32.totalorder 1, %s10
    %p139 = scmp.lt.s32.totalorder %s10, 3
    %p140 = pnand %p138, %p139
    %p141 = pneg %p140
    // Predicated region
    $region9: #{decoder_forward_batched.1} parent=5 // pred_check
      _
    $region10: #{decoder_forward_batched.1} parent=5 // pred_check_branch
      %143 = sbr.rel (%p140) target = $region12
    $region11: #{decoder_forward_batched.1} parent=5 // pred_region
      %s144 = ssub.s32 %s10, 1
      // Predicated region
      $region13: #{decoder_forward_batched.1} parent=11 // pred_check
        %p145 = pneg %p83
      $region14: #{decoder_forward_batched.1} parent=11 // pred_check_branch
        %147 = sbr.rel (%p145) target = $region16
      $region15: #{decoder_forward_batched.1} parent=11 // pred_region
        _
      $region16: #{decoder_forward_batched.1} parent=11 // pred_fallthru
        _
      // Predicated region
      $region17: #{decoder_forward_batched.1} parent=11 // pred_check
        %p148 = pneg %p104
      $region18: #{decoder_forward_batched.1} parent=11 // pred_check_branch
        %150 = sbr.rel (%p148) target = $region20
      $region19: #{decoder_forward_batched.1} parent=11 // pred_region
        _
      $region20: #{decoder_forward_batched.1} parent=11 // pred_fallthru
        _
    $region12: #{decoder_forward_batched.1} parent=5 // pred_fallthru
      _
    %p151 = scmp.lt.s32.totalorder %s10, 2
    // Predicated region
    $region21: #{decoder_forward_batched.1} parent=5 // pred_check
      %p152 = pneg %p151
    $region22: #{decoder_forward_batched.1} parent=5 // pred_check_branch
      %154 = sbr.rel (%p152) target = $region24
    $region23: #{decoder_forward_batched.1} parent=5 // pred_region
      // Predicated region
      $region25: #{decoder_forward_batched.1} parent=23 // pred_check
        %p155 = pneg %p30
      $region26: #{decoder_forward_batched.1} parent=23 // pred_check_branch
        %157 = sbr.rel (%p155) target = $region28
      $region27: #{decoder_forward_batched.1} parent=23 // pred_region
        %s158 = smul.u32 16, %s10
        %p159 = scmp.lt.s32.totalorder %s158, 31
        %s160 = scalar_select %p159, %s158, 31
        %s161 = smul.addr %s160, 8
        %s162 = scalar_lea.vmem %s0, %s161
        %s163 = smul.u32 16, %s10
      $region28: #{decoder_forward_batched.1} parent=23 // pred_fallthru
        _
      // Predicated region
      $region29: #{decoder_forward_batched.1} parent=23 // pred_check
        %p164 = pneg %p56
      $region30: #{decoder_forward_batched.1} parent=23 // pred_check_branch
        %166 = sbr.rel (%p164) target = $region32
      $region31: #{decoder_forward_batched.1} parent=23 // pred_region
        %s167 = smul.u32 16, %s10
        %p168 = scmp.lt.s32.totalorder %s167, 31
        %s169 = scalar_select %p168, %s167, 31
        %s170 = smul.addr %s169, 8
        %s171 = scalar_lea.vmem %s1, %s170
        %s172 = smul.u32 16, %s10
      $region32: #{decoder_forward_batched.1} parent=23 // pred_fallthru
        _
    $region24: #{decoder_forward_batched.1} parent=5 // pred_fallthru
      _
    %p173 = scmp.le.s32.totalorder 1, %s10
    %p174 = scmp.lt.s32.totalorder %s10, 3
    %p175 = pnand %p173, %p174
    %p176 = pneg %p175
    // Predicated region
    $region33: #{decoder_forward_batched.1} parent=5 // pred_check
      _
    $region34: #{decoder_forward_batched.1} parent=5 // pred_check_branch
      %178 = sbr.rel (%p175) target = $region36
    $region35: #{decoder_forward_batched.1} parent=5 // pred_region
      %s179 = ssub.s32 %s10, 1
      %s180 = smul.u32 16, %s15
      %p181 = scmp.lt.s32.totalorder %s180, 31
      %s182 = scalar_select %p181, %s180, 31
      %s183 = smul.addr %s182, 8
      %s184 = scalar_lea.vmem %s0, %s183
      %p185 = pneg %p36
      %p186 = pneg %p33
      %s187 = smul.u32 16, %s15
      %p188 = scmp.lt.s32.totalorder %s187, 31
      %s189 = scalar_select %p188, %s187, 31
      %s190 = smul.addr %s189, 8
      %s191 = scalar_lea.vmem %s1, %s190
      %p192 = pneg %p62
      %p193 = pneg %p59
      %p194 = pneg %p83
      %p195 = pneg %p80
      %p196 = pneg %p104
      %p197 = pneg %p101
      %p198 = pneg %p130
      %p199 = pneg %p127
      %s200 = smul.u32 16, %s15
      %p201 = scmp.lt.s32.totalorder %s200, 31
      %s202 = scalar_select %p201, %s200, 31
      %s203 = smul.addr %s202, 2
      %s204 = smul.addr %s203, 8
      %s205 = scalar_lea.vmem %s4, %s204
      %s206 = smul.u32 16, %s15
      %p207 = scmp.lt.s32.totalorder %s206, 31
      %s208 = scalar_select %p207, %s206, 31
      %s209 = smul.addr %s208, 8
      %s210 = scalar_lea.vmem %s0, %s209
      %s211 = smul.u32 16, %s15
      %s212 = smul.u32 16, %s15
      %p213 = scmp.lt.s32.totalorder %s212, 31
      %s214 = scalar_select %p213, %s212, 31
      %s215 = smul.addr %s214, 8
      %s216 = scalar_lea.vmem %s1, %s215
      %s217 = smul.u32 16, %s15
      %s218 = smul.u32 16, %s15
      %p219 = scmp.lt.s32.totalorder %s218, 31
      %s220 = scalar_select %p219, %s218, 31
      %s221 = smul.addr %s220, 2
      %s222 = smul.addr %s221, 8
      %s223 = scalar_lea.vmem %s4, %s222
      %s224 = smul.u32 16, %s15
      %v225 = vld [vmem:[%s210] sm:$0xff]
      %v226 = vld [vmem:[%s210 + $0x8] sm:$0xff]
      %v227 = vld [vmem:[%s210 + $0x10] sm:$0xff]
      %v228 = vld [vmem:[%s210 + $0x18] sm:$0xff]
      %v229 = vld [vmem:[%s210 + $0x20] sm:$0xff]
      %v230 = vld [vmem:[%s210 + $0x28] sm:$0xff]
      %v231 = vld [vmem:[%s210 + $0x30] sm:$0xff]
      %v232 = vld [vmem:[%s210 + $0x38] sm:$0xff]
      %v233 = vld [vmem:[%s210 + $0x40] sm:$0xff]
      %v234 = vld [vmem:[%s210 + $0x48] sm:$0xff]
      %v235 = vld [vmem:[%s210 + $0x50] sm:$0xff]
      %v236 = vld [vmem:[%s210 + $0x58] sm:$0xff]
      %v237 = vld [vmem:[%s210 + $0x60] sm:$0xff]
      %v238 = vld [vmem:[%s210 + $0x68] sm:$0xff]
      %v239 = vld [vmem:[%s210 + $0x70] sm:$0xff]
      %v240 = vld [vmem:[%s210 + $0x78] sm:$0xff]
      %v241 = vld [vmem:[%s2] sm:$0xff]
      %v242 = vld [vmem:[%s2 + $0x8] sm:$0xff]
      %v243 = vld [vmem:[%s2 + $0x10] sm:$0xff]
      %v244 = vld [vmem:[%s2 + $0x18] sm:$0xff]
      %v245 = vld [vmem:[%s2 + $0x20] sm:$0xff]
      %v246 = vld [vmem:[%s2 + $0x28] sm:$0xff]
      %v247 = vld [vmem:[%s2 + $0x30] sm:$0xff]
      %v248 = vld [vmem:[%s2 + $0x38] sm:$0xff]
      %vm249 = vcmask 523264
      %v251 = vsel %vm249, %v225, 0
      %v254 = vsel %vm249, %v226, 0
      %v257 = vsel %vm249, %v227, 0
      %v260 = vsel %vm249, %v228, 0
      %v263 = vsel %vm249, %v229, 0
      %v266 = vsel %vm249, %v230, 0
      %v269 = vsel %vm249, %v231, 0
      %v272 = vsel %vm249, %v232, 0
      %v275 = vsel %vm249, %v233, 0
      %v278 = vsel %vm249, %v234, 0
      %v281 = vsel %vm249, %v235, 0
      %v284 = vsel %vm249, %v236, 0
      %v287 = vsel %vm249, %v237, 0
      %v290 = vsel %vm249, %v238, 0
      %v293 = vsel %vm249, %v239, 0
      %v296 = vsel %vm249, %v240, 0
      %298 = vmatprep.subr.mxu0 0.0
      %299 = vmatpush1.msra.mxu0 0.0
      %300 = vmatprep.subr.mxu0 0.0
      %301 = vmatpush1.msra.mxu0 0.0
      %302 = vmatprep.subr.mxu0 0.0
      %303 = vmatpush1.msra.mxu0 0.0
      %304 = vmatprep.subr.mxu0 0.0
      %305 = vmatpush1.msra.mxu0 0.0
      %306 = vmatprep.subr.mxu0 0.0
      %307 = vmatpush1.msra.mxu0 0.0
      %308 = vmatprep.subr.mxu0 0.0
      %309 = vmatpush1.msra.mxu0 0.0
      %310 = vmatprep.subr.mxu0 0.0
      %311 = vmatpush1.msra.mxu0 0.0
      %312 = vmatprep.subr.mxu0 0.0
      %313 = vmatpush1.msra.mxu0 0.0
      %314 = vmatprep.subr.mxu0 0.0
      %315 = vmatpush1.msra.mxu0 %v248
      %316 = vmatprep.subr.mxu0 0.0
      %317 = vmatpush1.msra.mxu0 %v247
      %318 = vmatprep.subr.mxu0 0.0
      %319 = vmatpush1.msra.mxu0 %v246
      %320 = vmatprep.subr.mxu0 0.0
      %321 = vmatpush1.msra.mxu0 %v245
      %322 = vmatprep.subr.mxu0 0.0
      %323 = vmatpush1.msra.mxu0 %v244
      %324 = vmatprep.subr.mxu0 0.0
      %325 = vmatpush1.msra.mxu0 %v243
      %326 = vmatprep.subr.mxu0 0.0
      %327 = vmatpush1.msra.mxu0 %v242
      %328 = vmatprep.subr.mxu0 0.0
      %329 = vmatpush1.msra.mxu0 %v241
      %330 = vmatprep.subr.mxu0 0.0
      %331 = vmatpush2.msra.mxu0 0.0
      %332 = vmatprep.subr.mxu0 0.0
      %333 = vmatpush2.msra.mxu0 0.0
      %334 = vmatprep.subr.mxu0 0.0
      %335 = vmatpush2.msra.mxu0 0.0
      %336 = vmatprep.subr.mxu0 0.0
      %337 = vmatpush2.msra.mxu0 0.0
      %338 = vmatprep.subr.mxu0 0.0
      %339 = vmatpush2.msra.mxu0 0.0
      %340 = vmatprep.subr.mxu0 0.0
      %341 = vmatpush2.msra.mxu0 0.0
      %342 = vmatprep.subr.mxu0 0.0
      %343 = vmatpush2.msra.mxu0 0.0
      %344 = vmatprep.subr.mxu0 0.0
      %345 = vmatpush2.msra.mxu0 0.0
      %346 = vmatprep.subr.mxu0 0.0
      %347 = vmatpush2.msra.mxu0 0.0
      %348 = vmatprep.subr.mxu0 0.0
      %349 = vmatpush2.msra.mxu0 0.0
      %350 = vmatprep.subr.mxu0 0.0
      %351 = vmatpush2.msra.mxu0 0.0
      %352 = vmatprep.subr.mxu0 0.0
      %353 = vmatpush2.msra.mxu0 0.0
      %354 = vmatprep.subr.mxu0 0.0
      %355 = vmatpush2.msra.mxu0 0.0
      %356 = vmatprep.subr.mxu0 0.0
      %357 = vmatpush2.msra.mxu0 0.0
      %358 = vmatprep.subr.mxu0 0.0
      %359 = vmatpush2.msra.mxu0 0.0
      %360 = vmatprep.subr.mxu0 0.0
      %361 = vmatpush2.msra.mxu0 0.0
      %362 = vmatprep.mubr.f32.mxu0 0.0
      %363 = vmatmul.mubr.f32.gmra.mxu0 %v251
      %v364 = vpop.f32.mrf.mxu0
      %v365 = vadd.f32 0.0, %v364
      %v366 = vpop.f32.mrf.mxu0
      %367 = vmatprep.mubr.f32.mxu0 0.0
      %368 = vmatmul.mubr.f32.gmra.mxu0 %v254
      %v369 = vpop.f32.mrf.mxu0
      %v370 = vadd.f32 0.0, %v369
      %v371 = vpop.f32.mrf.mxu0
      %372 = vmatprep.mubr.f32.mxu0 0.0
      %373 = vmatmul.mubr.f32.gmra.mxu0 %v257
      %v374 = vpop.f32.mrf.mxu0
      %v375 = vadd.f32 0.0, %v374
      %v376 = vpop.f32.mrf.mxu0
      %377 = vmatprep.mubr.f32.mxu0 0.0
      %378 = vmatmul.mubr.f32.gmra.mxu0 %v260
      %v379 = vpop.f32.mrf.mxu0
      %v380 = vadd.f32 0.0, %v379
      %v381 = vpop.f32.mrf.mxu0
      %382 = vmatprep.mubr.f32.mxu0 0.0
      %383 = vmatmul.mubr.f32.gmra.mxu0 %v263
      %v384 = vpop.f32.mrf.mxu0
      %v385 = vadd.f32 0.0, %v384
      %v386 = vpop.f32.mrf.mxu0
      %387 = vmatprep.mubr.f32.mxu0 0.0
      %388 = vmatmul.mubr.f32.gmra.mxu0 %v266
      %v389 = vpop.f32.mrf.mxu0
      %v390 = vadd.f32 0.0, %v389
      %v391 = vpop.f32.mrf.mxu0
      %392 = vmatprep.mubr.f32.mxu0 0.0
      %393 = vmatmul.mubr.f32.gmra.mxu0 %v269
      %v394 = vpop.f32.mrf.mxu0
      %v395 = vadd.f32 0.0, %v394
      %v396 = vpop.f32.mrf.mxu0
      %397 = vmatprep.mubr.f32.mxu0 0.0
      %398 = vmatmul.mubr.f32.gmra.mxu0 %v272
      %v399 = vpop.f32.mrf.mxu0
      %v400 = vadd.f32 0.0, %v399
      %v401 = vpop.f32.mrf.mxu0
      %402 = vmatprep.mubr.f32.mxu0 0.0
      %403 = vmatmul.mubr.f32.gmra.mxu0 %v275
      %v404 = vpop.f32.mrf.mxu0
      %v405 = vadd.f32 0.0, %v404
      %v406 = vpop.f32.mrf.mxu0
      %407 = vmatprep.mubr.f32.mxu0 0.0
      %408 = vmatmul.mubr.f32.gmra.mxu0 %v278
      %v409 = vpop.f32.mrf.mxu0
      %v410 = vadd.f32 0.0, %v409
      %v411 = vpop.f32.mrf.mxu0
      %412 = vmatprep.mubr.f32.mxu0 0.0
      %413 = vmatmul.mubr.f32.gmra.mxu0 %v281
      %v414 = vpop.f32.mrf.mxu0
      %v415 = vadd.f32 0.0, %v414
      %v416 = vpop.f32.mrf.mxu0
      %417 = vmatprep.mubr.f32.mxu0 0.0
      %418 = vmatmul.mubr.f32.gmra.mxu0 %v284
      %v419 = vpop.f32.mrf.mxu0
      %v420 = vadd.f32 0.0, %v419
      %v421 = vpop.f32.mrf.mxu0
      %422 = vmatprep.mubr.f32.mxu0 0.0
      %423 = vmatmul.mubr.f32.gmra.mxu0 %v287
      %v424 = vpop.f32.mrf.mxu0
      %v425 = vadd.f32 0.0, %v424
      %v426 = vpop.f32.mrf.mxu0
      %427 = vmatprep.mubr.f32.mxu0 0.0
      %428 = vmatmul.mubr.f32.gmra.mxu0 %v290
      %v429 = vpop.f32.mrf.mxu0
      %v430 = vadd.f32 0.0, %v429
      %v431 = vpop.f32.mrf.mxu0
      %432 = vmatprep.mubr.f32.mxu0 0.0
      %433 = vmatmul.mubr.f32.gmra.mxu0 %v293
      %v434 = vpop.f32.mrf.mxu0
      %v435 = vadd.f32 0.0, %v434
      %v436 = vpop.f32.mrf.mxu0
      %437 = vmatprep.mubr.f32.mxu0 0.0
      %438 = vmatmul.mubr.f32.gmra.mxu0 %v296
      %v439 = vpop.f32.mrf.mxu0
      %v440 = vadd.f32 0.0, %v439
      %v441 = vpop.f32.mrf.mxu0
      %442 = vdwg.mxu0
      %v443 = vmax.f32 %v365, 0.0
      %v444 = vmax.f32 %v370, 0.0
      %v445 = vmax.f32 %v375, 0.0
      %v446 = vmax.f32 %v380, 0.0
      %v447 = vmax.f32 %v385, 0.0
      %v448 = vmax.f32 %v390, 0.0
      %v449 = vmax.f32 %v395, 0.0
      %v450 = vmax.f32 %v400, 0.0
      %v451 = vmax.f32 %v405, 0.0
      %v452 = vmax.f32 %v410, 0.0
      %v453 = vmax.f32 %v415, 0.0
      %v454 = vmax.f32 %v420, 0.0
      %v455 = vmax.f32 %v425, 0.0
      %v456 = vmax.f32 %v430, 0.0
      %v457 = vmax.f32 %v435, 0.0
      %v458 = vmax.f32 %v440, 0.0
      %v459 = vld [vmem:[%s216] sm:$0xff]
      %v460 = vld [vmem:[%s216 + $0x8] sm:$0xff]
      %v461 = vld [vmem:[%s216 + $0x10] sm:$0xff]
      %v462 = vld [vmem:[%s216 + $0x18] sm:$0xff]
      %v463 = vld [vmem:[%s216 + $0x20] sm:$0xff]
      %v464 = vld [vmem:[%s216 + $0x28] sm:$0xff]
      %v465 = vld [vmem:[%s216 + $0x30] sm:$0xff]
      %v466 = vld [vmem:[%s216 + $0x38] sm:$0xff]
      %v467 = vld [vmem:[%s216 + $0x40] sm:$0xff]
      %v468 = vld [vmem:[%s216 + $0x48] sm:$0xff]
      %v469 = vld [vmem:[%s216 + $0x50] sm:$0xff]
      %v470 = vld [vmem:[%s216 + $0x58] sm:$0xff]
      %v471 = vld [vmem:[%s216 + $0x60] sm:$0xff]
      %v472 = vld [vmem:[%s216 + $0x68] sm:$0xff]
      %v473 = vld [vmem:[%s216 + $0x70] sm:$0xff]
      %v474 = vld [vmem:[%s216 + $0x78] sm:$0xff]
      %v475 = vmul.f32 %v443, %v459
      %v476 = vmul.f32 %v444, %v460
      %v477 = vmul.f32 %v445, %v461
      %v478 = vmul.f32 %v446, %v462
      %v479 = vmul.f32 %v447, %v463
      %v480 = vmul.f32 %v448, %v464
      %v481 = vmul.f32 %v449, %v465
      %v482 = vmul.f32 %v450, %v466
      %v483 = vmul.f32 %v451, %v467
      %v484 = vmul.f32 %v452, %v468
      %v485 = vmul.f32 %v453, %v469
      %v486 = vmul.f32 %v454, %v470
      %v487 = vmul.f32 %v455, %v471
      %v488 = vmul.f32 %v456, %v472
      %v489 = vmul.f32 %v457, %v473
      %v490 = vmul.f32 %v458, %v474
      %v491 = vld [vmem:[%s3] sm:$0xff]
      %v492 = vld [vmem:[%s3 + $0x8] sm:$0xff]
      %v493 = vld [vmem:[%s3 + $0x10] sm:$0xff]
      %v494 = vld [vmem:[%s3 + $0x18] sm:$0xff]
      %v495 = vld [vmem:[%s3 + $0x20] sm:$0xff]
      %v496 = vld [vmem:[%s3 + $0x28] sm:$0xff]
      %v497 = vld [vmem:[%s3 + $0x30] sm:$0xff]
      %v498 = vld [vmem:[%s3 + $0x38] sm:$0xff]
      %v499 = vld [vmem:[%s3 + $0x40] sm:$0xff]
      %v500 = vld [vmem:[%s3 + $0x48] sm:$0xff]
      %v501 = vld [vmem:[%s3 + $0x50] sm:$0xff]
      %v502 = vld [vmem:[%s3 + $0x58] sm:$0xff]
      %v503 = vld [vmem:[%s3 + $0x60] sm:$0xff]
      %v504 = vld [vmem:[%s3 + $0x68] sm:$0xff]
      %v505 = vld [vmem:[%s3 + $0x70] sm:$0xff]
      %v506 = vld [vmem:[%s3 + $0x78] sm:$0xff]
      %507 = vmatprep.subr.mxu0 0.0
      %508 = vmatpush1.msra.mxu0 %v506
      %509 = vmatprep.subr.mxu0 0.0
      %510 = vmatpush1.msra.mxu0 %v505
      %511 = vmatprep.subr.mxu0 0.0
      %512 = vmatpush1.msra.mxu0 %v504
      %513 = vmatprep.subr.mxu0 0.0
      %514 = vmatpush1.msra.mxu0 %v503
      %515 = vmatprep.subr.mxu0 0.0
      %516 = vmatpush1.msra.mxu0 %v502
      %517 = vmatprep.subr.mxu0 0.0
      %518 = vmatpush1.msra.mxu0 %v501
      %519 = vmatprep.subr.mxu0 0.0
      %520 = vmatpush1.msra.mxu0 %v500
      %521 = vmatprep.subr.mxu0 0.0
      %522 = vmatpush1.msra.mxu0 %v499
      %523 = vmatprep.subr.mxu0 0.0
      %524 = vmatpush1.msra.mxu0 %v498
      %525 = vmatprep.subr.mxu0 0.0
      %526 = vmatpush1.msra.mxu0 %v497
      %527 = vmatprep.subr.mxu0 0.0
      %528 = vmatpush1.msra.mxu0 %v496
      %529 = vmatprep.subr.mxu0 0.0
      %530 = vmatpush1.msra.mxu0 %v495
      %531 = vmatprep.subr.mxu0 0.0
      %532 = vmatpush1.msra.mxu0 %v494
      %533 = vmatprep.subr.mxu0 0.0
      %534 = vmatpush1.msra.mxu0 %v493
      %535 = vmatprep.subr.mxu0 0.0
      %536 = vmatpush1.msra.mxu0 %v492
      %537 = vmatprep.subr.mxu0 0.0
      %538 = vmatpush1.msra.mxu0 %v491
      %539 = vmatprep.subr.mxu0 0.0
      %540 = vmatpush2.msra.mxu0 0.0
      %541 = vmatprep.subr.mxu0 0.0
      %542 = vmatpush2.msra.mxu0 0.0
      %543 = vmatprep.subr.mxu0 0.0
      %544 = vmatpush2.msra.mxu0 0.0
      %545 = vmatprep.subr.mxu0 0.0
      %546 = vmatpush2.msra.mxu0 0.0
      %547 = vmatprep.subr.mxu0 0.0
      %548 = vmatpush2.msra.mxu0 0.0
      %549 = vmatprep.subr.mxu0 0.0
      %550 = vmatpush2.msra.mxu0 0.0
      %551 = vmatprep.subr.mxu0 0.0
      %552 = vmatpush2.msra.mxu0 0.0
      %553 = vmatprep.subr.mxu0 0.0
      %554 = vmatpush2.msra.mxu0 0.0
      %555 = vmatprep.subr.mxu0 0.0
      %556 = vmatpush2.msra.mxu0 0.0
      %557 = vmatprep.subr.mxu0 0.0
      %558 = vmatpush2.msra.mxu0 0.0
      %559 = vmatprep.subr.mxu0 0.0
      %560 = vmatpush2.msra.mxu0 0.0
      %561 = vmatprep.subr.mxu0 0.0
      %562 = vmatpush2.msra.mxu0 0.0
      %563 = vmatprep.subr.mxu0 0.0
      %564 = vmatpush2.msra.mxu0 0.0
      %565 = vmatprep.subr.mxu0 0.0
      %566 = vmatpush2.msra.mxu0 0.0
      %567 = vmatprep.subr.mxu0 0.0
      %568 = vmatpush2.msra.mxu0 0.0
      %569 = vmatprep.subr.mxu0 0.0
      %570 = vmatpush2.msra.mxu0 0.0
      %571 = vmatprep.mubr.f32.mxu0 0.0
      %572 = vmatmul.mubr.f32.gmra.mxu0 %v475
      %v573 = vpop.f32.mrf.mxu0
      %v574 = vadd.f32 0.0, %v573
      %v575 = vpop.f32.mrf.mxu0
      %576 = vmatprep.mubr.f32.mxu0 0.0
      %577 = vmatmul.mubr.f32.gmra.mxu0 %v476
      %v578 = vpop.f32.mrf.mxu0
      %v579 = vadd.f32 0.0, %v578
      %v580 = vpop.f32.mrf.mxu0
      %581 = vmatprep.mubr.f32.mxu0 0.0
      %582 = vmatmul.mubr.f32.gmra.mxu0 %v477
      %v583 = vpop.f32.mrf.mxu0
      %v584 = vadd.f32 0.0, %v583
      %v585 = vpop.f32.mrf.mxu0
      %586 = vmatprep.mubr.f32.mxu0 0.0
      %587 = vmatmul.mubr.f32.gmra.mxu0 %v478
      %v588 = vpop.f32.mrf.mxu0
      %v589 = vadd.f32 0.0, %v588
      %v590 = vpop.f32.mrf.mxu0
      %591 = vmatprep.mubr.f32.mxu0 0.0
      %592 = vmatmul.mubr.f32.gmra.mxu0 %v479
      %v593 = vpop.f32.mrf.mxu0
      %v594 = vadd.f32 0.0, %v593
      %v595 = vpop.f32.mrf.mxu0
      %596 = vmatprep.mubr.f32.mxu0 0.0
      %597 = vmatmul.mubr.f32.gmra.mxu0 %v480
      %v598 = vpop.f32.mrf.mxu0
      %v599 = vadd.f32 0.0, %v598
      %v600 = vpop.f32.mrf.mxu0
      %601 = vmatprep.mubr.f32.mxu0 0.0
      %602 = vmatmul.mubr.f32.gmra.mxu0 %v481
      %v603 = vpop.f32.mrf.mxu0
      %v604 = vadd.f32 0.0, %v603
      %v605 = vpop.f32.mrf.mxu0
      %606 = vmatprep.mubr.f32.mxu0 0.0
      %607 = vmatmul.mubr.f32.gmra.mxu0 %v482
      %v608 = vpop.f32.mrf.mxu0
      %v609 = vadd.f32 0.0, %v608
      %v610 = vpop.f32.mrf.mxu0
      %611 = vmatprep.mubr.f32.mxu0 0.0
      %612 = vmatmul.mubr.f32.gmra.mxu0 %v483
      %v613 = vpop.f32.mrf.mxu0
      %v614 = vadd.f32 0.0, %v613
      %v615 = vpop.f32.mrf.mxu0
      %616 = vmatprep.mubr.f32.mxu0 0.0
      %617 = vmatmul.mubr.f32.gmra.mxu0 %v484
      %v618 = vpop.f32.mrf.mxu0
      %v619 = vadd.f32 0.0, %v618
      %v620 = vpop.f32.mrf.mxu0
      %621 = vmatprep.mubr.f32.mxu0 0.0
      %622 = vmatmul.mubr.f32.gmra.mxu0 %v485
      %v623 = vpop.f32.mrf.mxu0
      %v624 = vadd.f32 0.0, %v623
      %v625 = vpop.f32.mrf.mxu0
      %626 = vmatprep.mubr.f32.mxu0 0.0
      %627 = vmatmul.mubr.f32.gmra.mxu0 %v486
      %v628 = vpop.f32.mrf.mxu0
      %v629 = vadd.f32 0.0, %v628
      %v630 = vpop.f32.mrf.mxu0
      %631 = vmatprep.mubr.f32.mxu0 0.0
      %632 = vmatmul.mubr.f32.gmra.mxu0 %v487
      %v633 = vpop.f32.mrf.mxu0
      %v634 = vadd.f32 0.0, %v633
      %v635 = vpop.f32.mrf.mxu0
      %636 = vmatprep.mubr.f32.mxu0 0.0
      %637 = vmatmul.mubr.f32.gmra.mxu0 %v488
      %v638 = vpop.f32.mrf.mxu0
      %v639 = vadd.f32 0.0, %v638
      %v640 = vpop.f32.mrf.mxu0
      %641 = vmatprep.mubr.f32.mxu0 0.0
      %642 = vmatmul.mubr.f32.gmra.mxu0 %v489
      %v643 = vpop.f32.mrf.mxu0
      %v644 = vadd.f32 0.0, %v643
      %v645 = vpop.f32.mrf.mxu0
      %646 = vmatprep.mubr.f32.mxu0 0.0
      %647 = vmatmul.mubr.f32.gmra.mxu0 %v490
      %v648 = vpop.f32.mrf.mxu0
      %v649 = vadd.f32 0.0, %v648
      %v650 = vpop.f32.mrf.mxu0
      %651 = vdwg.mxu0
      %v668 = vrot.slane %v574, 7
      %v669 = vrot.slane %v579, 7
      %v670 = vrot.slane %v584, 7
      %v671 = vrot.slane %v589, 7
      %v672 = vrot.slane %v594, 7
      %v673 = vrot.slane %v599, 7
      %v674 = vrot.slane %v604, 7
      %v675 = vrot.slane %v609, 7
      %v676 = vrot.slane %v614, 7
      %v677 = vrot.slane %v619, 7
      %v678 = vrot.slane %v624, 7
      %v679 = vrot.slane %v629, 7
      %v680 = vrot.slane %v634, 7
      %v681 = vrot.slane %v639, 7
      %v682 = vrot.slane %v644, 7
      %v683 = vrot.slane %v649, 7
      %684 = vrot.lane.b32.xlu0 %v668, 96
      %v685 = vpop.permute.xlu0 %684
      %686 = vrot.lane.b32.xlu0 %v669, 96
      %v687 = vpop.permute.xlu0 %686
      %688 = vrot.lane.b32.xlu0 %v670, 96
      %v689 = vpop.permute.xlu0 %688
      %690 = vrot.lane.b32.xlu0 %v671, 96
      %v691 = vpop.permute.xlu0 %690
      %692 = vrot.lane.b32.xlu0 %v672, 96
      %v693 = vpop.permute.xlu0 %692
      %694 = vrot.lane.b32.xlu0 %v673, 96
      %v695 = vpop.permute.xlu0 %694
      %696 = vrot.lane.b32.xlu0 %v674, 96
      %v697 = vpop.permute.xlu0 %696
      %698 = vrot.lane.b32.xlu0 %v675, 96
      %v699 = vpop.permute.xlu0 %698
      %700 = vrot.lane.b32.xlu0 %v676, 96
      %v701 = vpop.permute.xlu0 %700
      %702 = vrot.lane.b32.xlu0 %v677, 96
      %v703 = vpop.permute.xlu0 %702
      %704 = vrot.lane.b32.xlu0 %v678, 96
      %v705 = vpop.permute.xlu0 %704
      %706 = vrot.lane.b32.xlu0 %v679, 96
      %v707 = vpop.permute.xlu0 %706
      %708 = vrot.lane.b32.xlu0 %v680, 96
      %v709 = vpop.permute.xlu0 %708
      %710 = vrot.lane.b32.xlu0 %v681, 96
      %v711 = vpop.permute.xlu0 %710
      %712 = vrot.lane.b32.xlu0 %v682, 96
      %v713 = vpop.permute.xlu0 %712
      %714 = vrot.lane.b32.xlu0 %v683, 96
      %v715 = vpop.permute.xlu0 %714
      %vm732 = vcmask 1040384
      %v733 = vsel %vm732, 0.0, %v685
      %v734 = vsel %vm732, 0.0, %v687
      %v735 = vsel %vm732, 0.0, %v689
      %v736 = vsel %vm732, 0.0, %v691
      %v737 = vsel %vm732, 0.0, %v693
      %v738 = vsel %vm732, 0.0, %v695
      %v739 = vsel %vm732, 0.0, %v697
      %v740 = vsel %vm732, 0.0, %v699
      %v741 = vsel %vm732, 0.0, %v701
      %v742 = vsel %vm732, 0.0, %v703
      %v743 = vsel %vm732, 0.0, %v705
      %v744 = vsel %vm732, 0.0, %v707
      %v745 = vsel %vm732, 0.0, %v709
      %v746 = vsel %vm732, 0.0, %v711
      %v747 = vsel %vm732, 0.0, %v713
      %v748 = vsel %vm732, 0.0, %v715
      %v749 = vadd.f32 %v574, %v733
      %v750 = vadd.f32 %v685, 0.0
      %v751 = vadd.f32 %v579, %v734
      %v752 = vadd.f32 %v687, 0.0
      %v753 = vadd.f32 %v584, %v735
      %v754 = vadd.f32 %v689, 0.0
      %v755 = vadd.f32 %v589, %v736
      %v756 = vadd.f32 %v691, 0.0
      %v757 = vadd.f32 %v594, %v737
      %v758 = vadd.f32 %v693, 0.0
      %v759 = vadd.f32 %v599, %v738
      %v760 = vadd.f32 %v695, 0.0
      %v761 = vadd.f32 %v604, %v739
      %v762 = vadd.f32 %v697, 0.0
      %v763 = vadd.f32 %v609, %v740
      %v764 = vadd.f32 %v699, 0.0
      %v765 = vadd.f32 %v614, %v741
      %v766 = vadd.f32 %v701, 0.0
      %v767 = vadd.f32 %v619, %v742
      %v768 = vadd.f32 %v703, 0.0
      %v769 = vadd.f32 %v624, %v743
      %v770 = vadd.f32 %v705, 0.0
      %v771 = vadd.f32 %v629, %v744
      %v772 = vadd.f32 %v707, 0.0
      %v773 = vadd.f32 %v634, %v745
      %v774 = vadd.f32 %v709, 0.0
      %v775 = vadd.f32 %v639, %v746
      %v776 = vadd.f32 %v711, 0.0
      %v777 = vadd.f32 %v644, %v747
      %v778 = vadd.f32 %v713, 0.0
      %v779 = vadd.f32 %v649, %v748
      %v780 = vadd.f32 %v715, 0.0
      %vm781 = vcmask 261120
      %v782 = vsel %vm781, %v749, 0.0
      %v783 = vsel %vm781, %v750, 0.0
      %v784 = vsel %vm781, %v751, 0.0
      %v785 = vsel %vm781, %v752, 0.0
      %v786 = vsel %vm781, %v753, 0.0
      %v787 = vsel %vm781, %v754, 0.0
      %v788 = vsel %vm781, %v755, 0.0
      %v789 = vsel %vm781, %v756, 0.0
      %v790 = vsel %vm781, %v757, 0.0
      %v791 = vsel %vm781, %v758, 0.0
      %v792 = vsel %vm781, %v759, 0.0
      %v793 = vsel %vm781, %v760, 0.0
      %v794 = vsel %vm781, %v761, 0.0
      %v795 = vsel %vm781, %v762, 0.0
      %v796 = vsel %vm781, %v763, 0.0
      %v797 = vsel %vm781, %v764, 0.0
      %v798 = vsel %vm781, %v765, 0.0
      %v799 = vsel %vm781, %v766, 0.0
      %v800 = vsel %vm781, %v767, 0.0
      %v801 = vsel %vm781, %v768, 0.0
      %v802 = vsel %vm781, %v769, 0.0
      %v803 = vsel %vm781, %v770, 0.0
      %v804 = vsel %vm781, %v771, 0.0
      %v805 = vsel %vm781, %v772, 0.0
      %v806 = vsel %vm781, %v773, 0.0
      %v807 = vsel %vm781, %v774, 0.0
      %v808 = vsel %vm781, %v775, 0.0
      %v809 = vsel %vm781, %v776, 0.0
      %v810 = vsel %vm781, %v777, 0.0
      %v811 = vsel %vm781, %v778, 0.0
      %v812 = vsel %vm781, %v779, 0.0
      %v813 = vsel %vm781, %v780, 0.0
      %814 = vst [vmem:[%s223] sm:$0xff] %v782
      %815 = vst [vmem:[%s223 + $0x8] sm:$0x1] %v783
      %816 = vst [vmem:[%s223 + $0x10] sm:$0xff] %v784
      %817 = vst [vmem:[%s223 + $0x18] sm:$0x1] %v785
      %818 = vst [vmem:[%s223 + $0x20] sm:$0xff] %v786
      %819 = vst [vmem:[%s223 + $0x28] sm:$0x1] %v787
      %820 = vst [vmem:[%s223 + $0x30] sm:$0xff] %v788
      %821 = vst [vmem:[%s223 + $0x38] sm:$0x1] %v789
      %822 = vst [vmem:[%s223 + $0x40] sm:$0xff] %v790
      %823 = vst [vmem:[%s223 + $0x48] sm:$0x1] %v791
      %824 = vst [vmem:[%s223 + $0x50] sm:$0xff] %v792
      %825 = vst [vmem:[%s223 + $0x58] sm:$0x1] %v793
      %826 = vst [vmem:[%s223 + $0x60] sm:$0xff] %v794
      %827 = vst [vmem:[%s223 + $0x68] sm:$0x1] %v795
      %828 = vst [vmem:[%s223 + $0x70] sm:$0xff] %v796
      %829 = vst [vmem:[%s223 + $0x78] sm:$0x1] %v797
      %830 = vst [vmem:[%s223 + $0x80] sm:$0xff] %v798
      %831 = vst [vmem:[%s223 + $0x88] sm:$0x1] %v799
      %832 = vst [vmem:[%s223 + $0x90] sm:$0xff] %v800
      %833 = vst [vmem:[%s223 + $0x98] sm:$0x1] %v801
      %834 = vst [vmem:[%s223 + $0xa0] sm:$0xff] %v802
      %835 = vst [vmem:[%s223 + $0xa8] sm:$0x1] %v803
      %836 = vst [vmem:[%s223 + $0xb0] sm:$0xff] %v804
      %837 = vst [vmem:[%s223 + $0xb8] sm:$0x1] %v805
      %838 = vst [vmem:[%s223 + $0xc0] sm:$0xff] %v806
      %839 = vst [vmem:[%s223 + $0xc8] sm:$0x1] %v807
      %840 = vst [vmem:[%s223 + $0xd0] sm:$0xff] %v808
      %841 = vst [vmem:[%s223 + $0xd8] sm:$0x1] %v809
      %842 = vst [vmem:[%s223 + $0xe0] sm:$0xff] %v810
      %843 = vst [vmem:[%s223 + $0xe8] sm:$0x1] %v811
      %844 = vst [vmem:[%s223 + $0xf0] sm:$0xff] %v812
      %845 = vst [vmem:[%s223 + $0xf8] sm:$0x1] %v813
      %s846 = smul.u32 16, %s15
      %p847 = scmp.lt.s32.totalorder %s846, 31
      %s848 = scalar_select %p847, %s846, 31
      %s849 = smul.addr %s848, 2
      %s850 = smul.addr %s849, 8
      %s851 = scalar_lea.vmem %s4, %s850
      // Predicated region
      $region37: #{decoder_forward_batched.1} parent=35 // pred_check
        %p852 = pneg %p127
      $region38: #{decoder_forward_batched.1} parent=35 // pred_check_branch
        %854 = sbr.rel (%p852) target = $region40
      $region39: #{decoder_forward_batched.1} parent=35 // pred_region
        %s855 = smul.u32 16, %s15
      $region40: #{decoder_forward_batched.1} parent=35 // pred_fallthru
        _
    $region36: #{decoder_forward_batched.1} parent=5 // pred_fallthru
      _
    %p856 = scmp.le.s32.totalorder 2, %s10
    // Predicated region
    $region41: #{decoder_forward_batched.1} parent=5 // pred_check
      %p857 = pneg %p856
    $region42: #{decoder_forward_batched.1} parent=5 // pred_check_branch
      %859 = sbr.rel (%p857) target = $region44
    $region43: #{decoder_forward_batched.1} parent=5 // pred_region
      %s860 = ssub.s32 %s10, 2
      // Predicated region
      $region45: #{decoder_forward_batched.1} parent=43 // pred_check
        %p861 = pneg %p133
      $region46: #{decoder_forward_batched.1} parent=43 // pred_check_branch
        %863 = sbr.rel (%p861) target = $region48
      $region47: #{decoder_forward_batched.1} parent=43 // pred_region
        %s864 = smul.u32 16, %s16
        %p865 = scmp.lt.s32.totalorder %s864, 31
        %s866 = scalar_select %p865, %s864, 31
        %s867 = smul.addr %s866, 2
        %s868 = smul.addr %s867, 8
        %s869 = scalar_lea.vmem %s4, %s868
      $region48: #{decoder_forward_batched.1} parent=43 // pred_fallthru
        _
    $region44: #{decoder_forward_batched.1} parent=5 // pred_fallthru
      _
  $region6: #{decoder_forward_batched.1} parent=0 // loop_footer
    %s14 = sadd.s32 1, %s10
  $region7: #{decoder_forward_batched.1} parent=0 // loop_footer_branch
    %9 = sbr.rel target = $region3
  $region8: #{decoder_forward_batched.1} parent=0 // loop_exit
    _

</llo_original>
